<compile_context>
chip_gen: v7x
topology: tpu7x:2x2x1
jax: 0.10.0
libtpu: 0.0.40
codegen_flags: <defaults>
</compile_context>

<pallas_src>
from typing import NamedTuple

import jax
import jax.numpy as jnp
from jax.experimental import pallas as pl
from jax.experimental.pallas import tpu as pltpu


# --------------------------------------------------------------------------
# helpers
# --------------------------------------------------------------------------
def _round_up(v, m):
    return (v + m - 1) // m * m


def _vmem_capacity_bytes():
    try:
        info = pltpu.get_tpu_info()
        cap = int(getattr(info, "vmem_capacity_bytes", 0))
        if cap > 0:
            return cap
    except Exception:
        pass
    return 64 * 1024 * 1024  # conservative default: v7x per-TC VMEM


def _pick_tile_pad(n, candidates):
    """Pick the tile first, then pad n up to a multiple of it.
    Minimal padded size wins; ties go to the larger tile (candidates descending)."""
    best_c, best_p = None, None
    for c in candidates:
        p = _round_up(n, c)
        if best_p is None or p < best_p:
            best_c, best_p = c, p
    return best_c, best_p


def _pick_batch_tiling(B, resident):
    Bp0 = _round_up(B, 8)
    if Bp0 <= 256:
        tb = Bp0
        if resident and Bp0 >= 16:
            # >=2 batch tiles so the single 'parallel' axis can use both v7x TCs.
            tb = _round_up(-(-Bp0 // 2), 8)
        return tb, _round_up(Bp0, tb)
    # Large batch: biggest tile with modest padding overhead.
    for tb in (256, 128, 64):
        Bp = _round_up(Bp0, tb)
        if Bp - Bp0 <= max(Bp0 // 8, 8):
            return tb, Bp
    return 128, _round_up(Bp0, 128)


# --------------------------------------------------------------------------
# kernels
# --------------------------------------------------------------------------
def _lstm_resident_kernel(xh_ref, w_ref, b_ref, cx_ref, hy_ref, cy_ref):
    # Whole-K, whole-H tile. The weight/bias block indices are constant across
    # the (batch-only) grid, so they are fetched once and stay VMEM-resident.
    gates = jnp.dot(xh_ref[...], w_ref[...], preferred_element_type=jnp.float32)
    gates = gates + b_ref[...].astype(jnp.float32)
    h = cx_ref.shape[1]
    ingate     = jax.nn.sigmoid(gates[:, 0 * h:1 * h])
    forgetgate = jax.nn.sigmoid(gates[:, 1 * h:2 * h])
    cellgate   = jnp.tanh(gates[:, 2 * h:3 * h])
    outgate    = jax.nn.sigmoid(gates[:, 3 * h:4 * h])

    cx = cx_ref[...].astype(jnp.float32)
    cy = forgetgate * cx + ingate * cellgate
    hy = outgate * jnp.tanh(cy)
    cy_ref[...] = cy.astype(cy_ref.dtype)
    hy_ref[...] = hy.astype(hy_ref.dtype)


def _lstm_tiled_kernel(xh_ref, w_ref, b_ref, cx_ref, hy_ref, cy_ref, acc_ref):
    k = pl.program_id(2)
    contrib = jnp.dot(xh_ref[...], w_ref[...], preferred_element_type=jnp.float32)

    @pl.when(k == 0)
    def _init():
        # Fold the fused bias into the first partial product: saves a full
        # (tb, 4*th) f32 accumulator write + read (helps the v5e store slot).
        acc_ref[...] = contrib + b_ref[...].astype(jnp.float32)

    @pl.when(k > 0)
    def _accum():
        acc_ref[...] += contrib

    @pl.when(k == pl.num_programs(2) - 1)
    def _finalize():
        gates = acc_ref[...]                    # (tb, 4*th) f32
        th = cx_ref.shape[1]
        # Columns are gate-block-permuted: [i | f | g | o], each th wide ->
        # 128-lane aligned slices.
        ingate     = jax.nn.sigmoid(gates[:, 0 * th:1 * th])
        forgetgate = jax.nn.sigmoid(gates[:, 1 * th:2 * th])
        cellgate   = jnp.tanh(gates[:, 2 * th:3 * th])
        outgate    = jax.nn.sigmoid(gates[:, 3 * th:4 * th])

        cx = cx_ref[...].astype(jnp.float32)
        cy = forgetgate * cx + ingate * cellgate
        hy = outgate * jnp.tanh(cy)
        cy_ref[...] = cy.astype(cy_ref.dtype)
        hy_ref[...] = hy.astype(hy_ref.dtype)


# --------------------------------------------------------------------------
# parameter preparation (one-time) + hot-path call
# --------------------------------------------------------------------------
class PackedLSTMParams(NamedTuple):
    w: jax.Array            # (Kp, 4*Hp), gate-block-permuted, param_dtype
    b: jax.Array            # (1, 4*Hp), f32, fused bias, same permutation
    input_size: int
    hidden_size: int
    Kp: int
    Hp: int
    th: int
    tk: int
    resident: bool
    vmem_limit: int
    param_dtype: object


def prepare_lstm_params(w_ih, w_hh, b_ih, b_hh, *, param_dtype=jnp.bfloat16,
                        max_resident_weight_bytes=None):
    """Pack weights/bias once.  w_ih: (4H, I), w_hh: (4H, H) (nn.Linear layout)."""
    H = w_hh.shape[1]
    I = w_ih.shape[1]
    K = I + H
    Hp0 = _round_up(H, 128)
    Kp0 = _round_up(K, 128)
    param_dtype = jnp.dtype(param_dtype)

    cap = _vmem_capacity_bytes()
    vmem_limit = min(cap * 3 // 4, 100 * 1024 * 1024)
    if max_resident_weight_bytes is None:
        max_resident_weight_bytes = cap // 4     # ~32 MiB v5e/v6e, ~16 MiB v7x

    resident = Kp0 * 4 * Hp0 * param_dtype.itemsize <= max_resident_weight_bytes
    if resident:
        th, Hp = Hp0, Hp0
        tk, Kp = Kp0, Kp0
    else:
        th, Hp = _pick_tile_pad(Hp0, (512, 256, 128))
        tk, Kp = _pick_tile_pad(Kp0, (1024, 512, 256, 128))

    # Fused weight (K, 4H) in PyTorch gate order [i, f, g, o], padded and
    # gate-block permuted so each contiguous 4*th column tile holds the
    # matching [i|f|g|o] slices for that hidden block.
    nH = Hp // th
    w = jnp.concatenate([w_ih, w_hh], axis=1).T.reshape(K, 4, H)
    w = jnp.pad(w, ((0, Kp - K), (0, 0), (0, Hp - H)))
    w = w.reshape(Kp, 4, nH, th).transpose(0, 2, 1, 3).reshape(Kp, 4 * Hp)
    w = w.astype(param_dtype)

    b = (b_ih + b_hh).astype(jnp.float32).reshape(4, H)
    b = jnp.pad(b, ((0, 0), (0, Hp - H)))
    b = b.reshape(4, nH, th).transpose(1, 0, 2).reshape(1, 4 * Hp)

    return PackedLSTMParams(w=w, b=b, input_size=I, hidden_size=H,
                            Kp=Kp, Hp=Hp, th=th, tk=tk, resident=resident,
                            vmem_limit=int(vmem_limit), param_dtype=param_dtype)


def lstm_cell_forward_nncf_packed(params, x, hx, cx):
    """Hot path: one LSTM cell step using pre-packed parameters."""
    B, I = x.shape
    H = hx.shape[1]
    assert I == params.input_size and H == params.hidden_size
    Kp, Hp, th, tk = params.Kp, params.Hp, params.th, params.tk
    K = I + H
    out_dtype = x.dtype
    out_isz = jnp.dtype(out_dtype).itemsize
    act_isz = params.param_dtype.itemsize

    tb, Bp = _pick_batch_tiling(B, params.resident)
    if params.resident:
        # Footprint guard (double-buffered, conservative) against the VMEM limit.
        w_bytes = params.w.size * params.w.dtype.itemsize
        while True:
            fp = 2 * (w_bytes + tb * Kp * act_isz + tb * Hp * cx.dtype.itemsize
                      + 2 * tb * Hp * out_isz + 4 * Hp * 4)
            if fp <= int(0.9 * params.vmem_limit) or tb <= 8:
                break
            tb = max(8, _round_up(tb // 2, 8))
        Bp = _round_up(_round_up(B, 8), tb)

    xh = jnp.concatenate([x, hx], axis=1).astype(params.param_dtype)
    xh = jnp.pad(xh, ((0, Bp - B), (0, Kp - K)))          # zero pad -> no effect
    cxp = jnp.pad(cx, ((0, Bp - B), (0, Hp - H)))

    if params.resident:
        grid = (Bp // tb,)
        in_specs = [
            pl.BlockSpec((tb, Kp), lambda i: (i, 0)),       # [x|hx]
            pl.BlockSpec((Kp, 4 * Hp), lambda i: (0, 0)),   # weights (resident)
            pl.BlockSpec((1, 4 * Hp), lambda i: (0, 0)),    # fused bias
            pl.BlockSpec((tb, Hp), lambda i: (i, 0)),       # cx
        ]
        out_specs = [pl.BlockSpec((tb, Hp), lambda i: (i, 0))] * 2
        scratch_shapes = []
        kernel = _lstm_resident_kernel
        dims = ("parallel",)
        bytes_accessed = (xh.size * xh.dtype.itemsize
                          + params.w.size * params.w.dtype.itemsize
                          + params.b.size * 4
                          + cxp.size * cxp.dtype.itemsize
                          + 2 * Bp * Hp * out_isz)
    else:
        nb, nh, nk = Bp // tb, Hp // th, Kp // tk
        grid = (nb, nh, nk)
        in_specs = [
            # TODO(synk): xh is re-fetched once per hidden tile (nh x); make it
            # (tb, Kp) j/k-invariant if nh is large and xh fits VMEM.
            pl.BlockSpec((tb, tk), lambda i, j, k: (i, k)),       # [x|hx]
            pl.BlockSpec((tk, 4 * th), lambda i, j, k: (k, j)),   # weights
            pl.BlockSpec((1, 4 * th), lambda i, j, k: (0, j)),    # bias
            pl.BlockSpec((tb, th), lambda i, j, k: (i, j)),       # cx
        ]
        out_specs = [pl.BlockSpec((tb, th), lambda i, j, k: (i, j))] * 2
        scratch_shapes = [pltpu.VMEM((tb, 4 * th), jnp.float32)]
        kernel = _lstm_tiled_kernel
        dims = ("parallel", "parallel", "arbitrary")
        bytes_accessed = (xh.size * xh.dtype.itemsize * nh
                          + params.w.size * params.w.dtype.itemsize * nb
                          + params.b.size * 4 * nb
                          + cxp.size * cxp.dtype.itemsize
                          + 2 * Bp * Hp * out_isz)

    cost = pl.CostEstimate(
        flops=2 * Bp * Kp * 4 * Hp,
        transcendentals=5 * Bp * Hp,
        bytes_accessed=int(bytes_accessed),
    )

    hy, cy = pl.pallas_call(
        kernel,
        out_shape=(jax.ShapeDtypeStruct((Bp, Hp), out_dtype),
                   jax.ShapeDtypeStruct((Bp, Hp), out_dtype)),
        grid_spec=pltpu.PrefetchScalarGridSpec(
            num_scalar_prefetch=0,
            grid=grid,
            in_specs=in_specs,
            out_specs=out_specs,
            scratch_shapes=scratch_shapes,
        ),
        compiler_params=pltpu.CompilerParams(
            dimension_semantics=dims,
            vmem_limit_bytes=params.vmem_limit,
        ),
        cost_estimate=cost,
    )(xh, params.w, params.b, cxp)

    return hy[:B, :H], cy[:B, :H]


def lstm_cell_forward_nncf(x, hx, cx, w_ih, w_hh, b_ih, b_hh, *,
                           param_dtype=jnp.bfloat16):
    """Convenience wrapper (re-packs params each call).  For repeated/per-step
    use, call prepare_lstm_params() once and lstm_cell_forward_nncf_packed()."""
    params = prepare_lstm_params(w_ih, w_hh, b_ih, b_hh, param_dtype=param_dtype)
    return lstm_cell_forward_nncf_packed(params, x, hx, cx)


# --------------------------------------------------------------------------
# reference + self-test
# --------------------------------------------------------------------------
def _reference(x, hx, cx, w_ih, w_hh, b_ih, b_hh):
    gates = x @ w_ih.T + b_ih + hx @ w_hh.T + b_hh
    H = hx.shape[1]
    i, f, g, o = (gates[:, 0:H], gates[:, H:2 * H],
                  gates[:, 2 * H:3 * H], gates[:, 3 * H:4 * H])
    i, f, g, o = jax.nn.sigmoid(i), jax.nn.sigmoid(f), jnp.tanh(g), jax.nn.sigmoid(o)
    cy = f * cx + i * g
    hy = o * jnp.tanh(cy)
    return hy, cy


def _make_inputs(key, B, I, H):
    ks = jax.random.split(key, 7)
    bound_i = 1.0 / (I ** 0.5)
    bound_h = 1.0 / (H ** 0.5)
    x = jax.random.normal(ks[0], (B, I), jnp.float32)
    hx = jax.random.normal(ks[1], (B, H), jnp.float32)
    cx = jax.random.normal(ks[2], (B, H), jnp.float32)
    w_ih = jax.random.uniform(ks[3], (4 * H, I), jnp.float32, -bound_i, bound_i)
    w_hh = jax.random.uniform(ks[4], (4 * H, H), jnp.float32, -bound_h, bound_h)
    b_ih = jax.random.uniform(ks[5], (4 * H,), jnp.float32, -bound_i, bound_i)
    b_hh = jax.random.uniform(ks[6], (4 * H,), jnp.float32, -bound_h, bound_h)
    return x, hx, cx, w_ih, w_hh, b_ih, b_hh


if __name__ == "__main__":
    # Shapes implied by the module demo: batch=2, input=16, hidden=32.
    args = _make_inputs(jax.random.PRNGKey(0), 2, 16, 32)
    x, hx, cx, w_ih, w_hh, b_ih, b_hh = args
    hy_r, cy_r = _reference(*args)

    # 1) f32 params, resident-weight fast path (pre-packed params, hot path).
    p32 = prepare_lstm_params(w_ih, w_hh, b_ih, b_hh, param_dtype=jnp.float32)
    assert p32.resident
    hy, cy = lstm_cell_forward_nncf_packed(p32, x, hx, cx)
    jax.block_until_ready((hy, cy))
    assert jnp.allclose(hy, hy_r, atol=1e-4, rtol=1e-4)
    assert jnp.allclose(cy, cy_r, atol=1e-4, rtol=1e-4)

    # 2) Default bf16 params/activations (halved weight HBM traffic).
    hy2, cy2 = lstm_cell_forward_nncf(x, hx, cx, w_ih, w_hh, b_ih, b_hh)
    jax.block_until_ready((hy2, cy2))
    assert jnp.allclose(hy2, hy_r, atol=5e-2, rtol=5e-2)
    assert jnp.allclose(cy2, cy_r, atol=5e-2, rtol=5e-2)

    # 3) Forced tiled fallback (multi hidden/K tiles) exercises the gate-block
    #    column permutation, K accumulation, bias-fold init and padding paths.
    args3 = _make_inputs(jax.random.PRNGKey(1), 24, 272, 384)
    p3 = prepare_lstm_params(args3[3], args3[4], args3[5], args3[6],
                             param_dtype=jnp.float32,
                             max_resident_weight_bytes=0)
    assert not p3.resident
    hy3, cy3 = lstm_cell_forward_nncf_packed(p3, args3[0], args3[1], args3[2])
    jax.block_until_ready((hy3, cy3))
    hy3_r, cy3_r = _reference(*args3)
    assert jnp.allclose(hy3, hy3_r, atol=2e-2, rtol=2e-2)
    assert jnp.allclose(cy3, cy3_r, atol=2e-2, rtol=2e-2)

    # 4) Resident path with >=2 batch tiles (parallel grid axis >= 2).
    args4 = _make_inputs(jax.random.PRNGKey(2), 40, 128, 256)
    p4 = prepare_lstm_params(args4[3], args4[4], args4[5], args4[6],
                             param_dtype=jnp.float32)
    hy4, cy4 = lstm_cell_forward_nncf_packed(p4, args4[0], args4[1], args4[2])
    jax.block_until_ready((hy4, cy4))
    hy4_r, cy4_r = _reference(*args4)
    assert jnp.allclose(hy4, hy4_r, atol=2e-2, rtol=2e-2)
    assert jnp.allclose(cy4, cy4_r, atol=2e-2, rtol=2e-2)

    print("KERNEL_OK")
</pallas_src>

<mosaic_0001>
module attributes {stable_mosaic.version = 11 : i64} {
  func.func @_lstm_resident_kernel(%arg0: i32, %arg1: memref<8x128xf32, #tpu.memory_space<vmem>>, %arg2: memref<128x512xf32, #tpu.memory_space<vmem>>, %arg3: memref<1x512xf32, #tpu.memory_space<vmem>>, %arg4: memref<8x128xf32, #tpu.memory_space<vmem>>, %arg5: memref<8x128xf32, #tpu.memory_space<vmem>>, %arg6: memref<8x128xf32, #tpu.memory_space<vmem>>) attributes {dimension_semantics = [#tpu.dimension_semantics<parallel>], iteration_bounds = array<i64: 1>, scalar_prefetch = 0 : i64, scratch_operands = 0 : i64, tpu.core_type = #tpu.core_type<tc>, window_params = [{transform_indices = @transform_0, window_bounds = array<i64: 8, 128>}, {pipeline_mode = #tpu.pipeline_mode<synchronous>, transform_indices = @transform_1, window_bounds = array<i64: 128, 512>}, {pipeline_mode = #tpu.pipeline_mode<synchronous>, transform_indices = @transform_2, window_bounds = array<i64: 1, 512>}, {transform_indices = @transform_3, window_bounds = array<i64: 8, 128>}, {transform_indices = @transform_4, window_bounds = array<i64: 8, 128>}, {transform_indices = @transform_5, window_bounds = array<i64: 8, 128>}]} {
    %c0 = arith.constant 0 : index
    %c0_0 = arith.constant 0 : index
    %0 = vector.load %arg1[%c0, %c0_0] : memref<8x128xf32, #tpu.memory_space<vmem>>, vector<8x128xf32>
    %c0_1 = arith.constant 0 : index
    %c0_2 = arith.constant 0 : index
    %1 = vector.load %arg2[%c0_1, %c0_2] : memref<128x512xf32, #tpu.memory_space<vmem>>, vector<128x512xf32>
    %cst = arith.constant dense<0.000000e+00> : vector<8x512xf32>
    %2 = tpu.matmul %0, %1, %cst {dimension_numbers = #tpu.dot_dimension_numbers<[1], [0], [0], [1], [0, 0, 1, 1], [], []>} : vector<8x128xf32>, vector<128x512xf32>, vector<8x512xf32> -> vector<8x512xf32>
    %c0_3 = arith.constant 0 : index
    %c0_4 = arith.constant 0 : index
    %3 = vector.load %arg3[%c0_3, %c0_4] : memref<1x512xf32, #tpu.memory_space<vmem>>, vector<1x512xf32>
    %4 = vector.broadcast %3 : vector<1x512xf32> to vector<8x512xf32>
    %5 = arith.addf %2, %4 : vector<8x512xf32>
    %6 = vector.extract_strided_slice %5 {offsets = [0, 0], sizes = [8, 128], strides = [1, 1]} : vector<8x512xf32> to vector<8x128xf32>
    %7 = arith.negf %6 : vector<8x128xf32>
    %8 = math.exp %7 : vector<8x128xf32>
    %cst_5 = arith.constant 1.000000e+00 : f32
    %9 = vector.broadcast %cst_5 : f32 to vector<8x128xf32>
    %10 = arith.addf %9, %8 : vector<8x128xf32>
    %11 = arith.divf %9, %10 : vector<8x128xf32>
    %12 = vector.extract_strided_slice %5 {offsets = [0, 128], sizes = [8, 128], strides = [1, 1]} : vector<8x512xf32> to vector<8x128xf32>
    %13 = arith.negf %12 : vector<8x128xf32>
    %14 = math.exp %13 : vector<8x128xf32>
    %cst_6 = arith.constant 1.000000e+00 : f32
    %15 = vector.broadcast %cst_6 : f32 to vector<8x128xf32>
    %16 = arith.addf %15, %14 : vector<8x128xf32>
    %17 = arith.divf %15, %16 : vector<8x128xf32>
    %18 = vector.extract_strided_slice %5 {offsets = [0, 256], sizes = [8, 128], strides = [1, 1]} : vector<8x512xf32> to vector<8x128xf32>
    %19 = math.tanh %18 : vector<8x128xf32>
    %20 = vector.extract_strided_slice %5 {offsets = [0, 384], sizes = [8, 128], strides = [1, 1]} : vector<8x512xf32> to vector<8x128xf32>
    %21 = arith.negf %20 : vector<8x128xf32>
    %22 = math.exp %21 : vector<8x128xf32>
    %cst_7 = arith.constant 1.000000e+00 : f32
    %23 = vector.broadcast %cst_7 : f32 to vector<8x128xf32>
    %24 = arith.addf %23, %22 : vector<8x128xf32>
    %25 = arith.divf %23, %24 : vector<8x128xf32>
    %c0_8 = arith.constant 0 : index
    %c0_9 = arith.constant 0 : index
    %26 = vector.load %arg4[%c0_8, %c0_9] : memref<8x128xf32, #tpu.memory_space<vmem>>, vector<8x128xf32>
    %27 = arith.mulf %17, %26 : vector<8x128xf32>
    %28 = arith.mulf %11, %19 : vector<8x128xf32>
    %29 = arith.addf %27, %28 : vector<8x128xf32>
    %30 = math.tanh %29 : vector<8x128xf32>
    %31 = arith.mulf %25, %30 : vector<8x128xf32>
    %c0_10 = arith.constant 0 : index
    %c0_11 = arith.constant 0 : index
    %32 = vector.load %arg6[%c0_10, %c0_11] : memref<8x128xf32, #tpu.memory_space<vmem>>, vector<8x128xf32>
    tpu.vector_store %arg6[%c0_10, %c0_11], %29 {strides = array<i32>} : memref<8x128xf32, #tpu.memory_space<vmem>>, vector<8x128xf32>,
    %c0_12 = arith.constant 0 : index
    %c0_13 = arith.constant 0 : index
    %33 = vector.load %arg5[%c0_12, %c0_13] : memref<8x128xf32, #tpu.memory_space<vmem>>, vector<8x128xf32>
    tpu.vector_store %arg5[%c0_12, %c0_13], %31 {strides = array<i32>} : memref<8x128xf32, #tpu.memory_space<vmem>>, vector<8x128xf32>,
    return
  }
  func.func @transform_0(%arg0: i32) -> (i32, i32) {
    %c0_i32 = arith.constant 0 : i32
    %c0_i32_0 = arith.constant 0 : i32
    return %arg0, %c0_i32 : i32, i32
  }
  func.func @transform_1(%arg0: i32) -> (i32, i32) {
    %c0_i32 = arith.constant 0 : i32
    %c0_i32_0 = arith.constant 0 : i32
    %c0_i32_1 = arith.constant 0 : i32
    return %c0_i32, %c0_i32_0 : i32, i32
  }
  func.func @transform_2(%arg0: i32) -> (i32, i32) {
    %c0_i32 = arith.constant 0 : i32
    %c0_i32_0 = arith.constant 0 : i32
    %c0_i32_1 = arith.constant 0 : i32
    return %c0_i32, %c0_i32_0 : i32, i32
  }
  func.func @transform_3(%arg0: i32) -> (i32, i32) {
    %c0_i32 = arith.constant 0 : i32
    %c0_i32_0 = arith.constant 0 : i32
    return %arg0, %c0_i32 : i32, i32
  }
  func.func @transform_4(%arg0: i32) -> (i32, i32) {
    %c0_i32 = arith.constant 0 : i32
    %c0_i32_0 = arith.constant 0 : i32
    return %arg0, %c0_i32 : i32, i32
  }
  func.func @transform_5(%arg0: i32) -> (i32, i32) {
    %c0_i32 = arith.constant 0 : i32
    %c0_i32_0 = arith.constant 0 : i32
    return %arg0, %c0_i32 : i32, i32
  }
}

</mosaic_0001>

<llo_original>
// kernel: tpu_custom_call.1
$region0: #{tpu_custom_call.1}
  #allocation0 [shape = 'u32[]', space=smem, size = 0x4, offset = 0x4, fixed_abs, tag = 'smem constant byte address 0x4 - core index']
  #allocation1 [shape = 'u32[144,128]{1,0:T(1,128)}', space=vmem, size = 0x12000, scoped, tag = 'internal scratch']
  %s0 = inlined_call_operand.hbm [shape: f32[8,128], index: 0, kind: input, shape index: {}]
  %s1 = inlined_call_operand.hbm [shape: f32[128,512], index: 1, kind: input, shape index: {}]
  %s2 = inlined_call_operand.hbm [shape: f32[1,512], index: 2, kind: input, shape index: {}]
  %s3 = inlined_call_operand.vmem [shape: f32[8,128], index: 3, kind: input, shape index: {}]
  %s4 = inlined_call_operand.hbm [shape: f32[8,128], index: 4, kind: output, shape index: {0}]
  %s5 = inlined_call_operand.hbm [shape: f32[8,128], index: 5, kind: output, shape index: {1}]
  %6 = xla_tuple %s4, %s5
  %s7 = sld [smem:[#allocation0]]
  $region46: #{tpu_custom_call.1} parent=0
    _
  %s9 = ssub.s32 1, %s7
  %s10 = scalar_select 0, %s9, %s7
  $region1: #{tpu_custom_call.1} parent=0
    #allocation2 [shape = 'u8[4096]{0}', space=vmem, size = 0x1000, scoped, tag = 'input window, operand 0, single buffered']
    #allocation3 [shape = 's32[1]{0}', space=sflag, size = 0x4, scoped, tag = 'scoped memory for tpu_custom_call.1']
    #allocation4 [shape = 's32[1]{0}', space=sflag, size = 0x4, scoped, tag = 'scoped memory for tpu_custom_call.1']
    #allocation5 [shape = 'u8[262144]{0}', space=vmem, size = 0x40000, scoped, tag = 'input window, operand 1, single buffered']
    #allocation6 [shape = 's32[1]{0}', space=sflag, size = 0x4, scoped, tag = 'scoped memory for tpu_custom_call.1']
    #allocation7 [shape = 'u8[2048]{0}', space=vmem, size = 0x800, scoped, tag = 'input window, operand 2, single buffered']
    #allocation8 [shape = 'u8[4096]{0}', space=vmem, size = 0x1000, scoped, tag = 'output window, operand 0, single buffered']
    #allocation9 [shape = 'u8[4096]{0}', space=vmem, size = 0x1000, scoped, tag = 'output window, operand 1, single buffered']
    #allocation10 [shape = 's32[1]{0}', space=sflag, size = 0x4, scoped, tag = 'scoped memory for tpu_custom_call.1']
    %11 = vsyncpa [#allocation3], 0
    %12 = vsyncpa [#allocation6], 0
    %13 = vsyncpa [#allocation4], 0
    %14 = vsyncpa [#allocation10], 0
    // Predicated region
    $region2: #{tpu_custom_call.1} parent=1 // pred_check
      _
    $region3: #{tpu_custom_call.1} parent=1 // pred_check_branch
      %16 = sbr.rel (0) target = $region5
    $region4: #{tpu_custom_call.1} parent=1 // pred_region
      %s18 = ssub.s32 128, 128
      %19 = vsyncadd [#allocation3], %s18
      %s21 = sshll.u32 [#allocation2], 4
      %s22 = int_to_ptr.vmem [resolvable:$true] %s21
      %24 = dma.hbm_to_vmem [thread:$0]  %s0, 128, %s22, [#allocation3]
    $region5: #{tpu_custom_call.1} parent=1 // pred_fallthru
      _
    // Predicated region
    $region6: #{tpu_custom_call.1} parent=1 // pred_check
      _
    $region7: #{tpu_custom_call.1} parent=1 // pred_check_branch
      %26 = sbr.rel (0) target = $region9
    $region8: #{tpu_custom_call.1} parent=1 // pred_region
      %s28 = ssub.s32 8192, 8192
      %29 = vsyncadd [#allocation6], %s28
      %s30 = sshll.u32 [#allocation5], 4
      %s31 = int_to_ptr.vmem [resolvable:$true] %s30
      %36 = dma.hbm_to_vmem [thread:$0]  %s1, 8192, %s31, [#allocation6], 512, 512, 32
    $region9: #{tpu_custom_call.1} parent=1 // pred_fallthru
      _
    // Predicated region
    $region10: #{tpu_custom_call.1} parent=1 // pred_check
      _
    $region11: #{tpu_custom_call.1} parent=1 // pred_check_branch
      %38 = sbr.rel (0) target = $region13
    $region12: #{tpu_custom_call.1} parent=1 // pred_region
      %s40 = ssub.s32 64, 64
      %41 = vsyncadd [#allocation6], %s40
      %s43 = sshll.u32 [#allocation7], 4
      %s44 = int_to_ptr.vmem [resolvable:$true] %s43
      %46 = dma.hbm_to_vmem [thread:$0]  %s2, 64, %s44, [#allocation6]
    $region13: #{tpu_custom_call.1} parent=1 // pred_fallthru
      _
    // Predicated region
    $region14: #{tpu_custom_call.1} parent=1 // pred_check
      _
    $region15: #{tpu_custom_call.1} parent=1 // pred_check_branch
      %48 = sbr.rel (0) target = $region17
    $region16: #{tpu_custom_call.1} parent=1 // pred_region
      _
    $region17: #{tpu_custom_call.1} parent=1 // pred_fallthru
      _
    // Predicated region
    $region18: #{tpu_custom_call.1} parent=1 // pred_check
      _
    $region19: #{tpu_custom_call.1} parent=1 // pred_check_branch
      %50 = sbr.rel (0) target = $region21
    $region20: #{tpu_custom_call.1} parent=1 // pred_region
      %51 = dma.done [#allocation3], 128
    $region21: #{tpu_custom_call.1} parent=1 // pred_fallthru
      _
    // Predicated region
    $region22: #{tpu_custom_call.1} parent=1 // pred_check
      _
    $region23: #{tpu_custom_call.1} parent=1 // pred_check_branch
      %53 = sbr.rel (0) target = $region25
    $region24: #{tpu_custom_call.1} parent=1 // pred_region
      %54 = dma.done [#allocation6], 8192
    $region25: #{tpu_custom_call.1} parent=1 // pred_fallthru
      _
    // Predicated region
    $region26: #{tpu_custom_call.1} parent=1 // pred_check
      _
    $region27: #{tpu_custom_call.1} parent=1 // pred_check_branch
      %56 = sbr.rel (0) target = $region29
    $region28: #{tpu_custom_call.1} parent=1 // pred_region
      %57 = dma.done [#allocation6], 64
    $region29: #{tpu_custom_call.1} parent=1 // pred_fallthru
      _
    %v58 = vld [vmem:[#allocation2] sm:$0xff]
    %v59 = vld [vmem:[#allocation5] sm:$0xff]
    %v60 = vld [vmem:[#allocation5 + $0x8] sm:$0xff]
    %v61 = vld [vmem:[#allocation5 + $0x10] sm:$0xff]
    %v62 = vld [vmem:[#allocation5 + $0x18] sm:$0xff]
    %v63 = vld [vmem:[#allocation5 + $0x20] sm:$0xff]
    %v64 = vld [vmem:[#allocation5 + $0x28] sm:$0xff]
    %v65 = vld [vmem:[#allocation5 + $0x30] sm:$0xff]
    %v66 = vld [vmem:[#allocation5 + $0x38] sm:$0xff]
    %v67 = vld [vmem:[#allocation5 + $0x40] sm:$0xff]
    %v68 = vld [vmem:[#allocation5 + $0x48] sm:$0xff]
    %v69 = vld [vmem:[#allocation5 + $0x50] sm:$0xff]
    %v70 = vld [vmem:[#allocation5 + $0x58] sm:$0xff]
    %v71 = vld [vmem:[#allocation5 + $0x60] sm:$0xff]
    %v72 = vld [vmem:[#allocation5 + $0x68] sm:$0xff]
    %v73 = vld [vmem:[#allocation5 + $0x70] sm:$0xff]
    %v74 = vld [vmem:[#allocation5 + $0x78] sm:$0xff]
    %v75 = vld [vmem:[#allocation5 + $0x80] sm:$0xff]
    %v76 = vld [vmem:[#allocation5 + $0x88] sm:$0xff]
    %v77 = vld [vmem:[#allocation5 + $0x90] sm:$0xff]
    %v78 = vld [vmem:[#allocation5 + $0x98] sm:$0xff]
    %v79 = vld [vmem:[#allocation5 + $0xa0] sm:$0xff]
    %v80 = vld [vmem:[#allocation5 + $0xa8] sm:$0xff]
    %v81 = vld [vmem:[#allocation5 + $0xb0] sm:$0xff]
    %v82 = vld [vmem:[#allocation5 + $0xb8] sm:$0xff]
    %v83 = vld [vmem:[#allocation5 + $0xc0] sm:$0xff]
    %v84 = vld [vmem:[#allocation5 + $0xc8] sm:$0xff]
    %v85 = vld [vmem:[#allocation5 + $0xd0] sm:$0xff]
    %v86 = vld [vmem:[#allocation5 + $0xd8] sm:$0xff]
    %v87 = vld [vmem:[#allocation5 + $0xe0] sm:$0xff]
    %v88 = vld [vmem:[#allocation5 + $0xe8] sm:$0xff]
    %v89 = vld [vmem:[#allocation5 + $0xf0] sm:$0xff]
    %v90 = vld [vmem:[#allocation5 + $0xf8] sm:$0xff]
    %v91 = vld [vmem:[#allocation5 + $0x100] sm:$0xff]
    %v92 = vld [vmem:[#allocation5 + $0x108] sm:$0xff]
    %v93 = vld [vmem:[#allocation5 + $0x110] sm:$0xff]
    %v94 = vld [vmem:[#allocation5 + $0x118] sm:$0xff]
    %v95 = vld [vmem:[#allocation5 + $0x120] sm:$0xff]
    %v96 = vld [vmem:[#allocation5 + $0x128] sm:$0xff]
    %v97 = vld [vmem:[#allocation5 + $0x130] sm:$0xff]
    %v98 = vld [vmem:[#allocation5 + $0x138] sm:$0xff]
    %v99 = vld [vmem:[#allocation5 + $0x140] sm:$0xff]
    %v100 = vld [vmem:[#allocation5 + $0x148] sm:$0xff]
    %v101 = vld [vmem:[#allocation5 + $0x150] sm:$0xff]
    %v102 = vld [vmem:[#allocation5 + $0x158] sm:$0xff]
    %v103 = vld [vmem:[#allocation5 + $0x160] sm:$0xff]
    %v104 = vld [vmem:[#allocation5 + $0x168] sm:$0xff]
    %v105 = vld [vmem:[#allocation5 + $0x170] sm:$0xff]
    %v106 = vld [vmem:[#allocation5 + $0x178] sm:$0xff]
    %v107 = vld [vmem:[#allocation5 + $0x180] sm:$0xff]
    %v108 = vld [vmem:[#allocation5 + $0x188] sm:$0xff]
    %v109 = vld [vmem:[#allocation5 + $0x190] sm:$0xff]
    %v110 = vld [vmem:[#allocation5 + $0x198] sm:$0xff]
    %v111 = vld [vmem:[#allocation5 + $0x1a0] sm:$0xff]
    %v112 = vld [vmem:[#allocation5 + $0x1a8] sm:$0xff]
    %v113 = vld [vmem:[#allocation5 + $0x1b0] sm:$0xff]
    %v114 = vld [vmem:[#allocation5 + $0x1b8] sm:$0xff]
    %v115 = vld [vmem:[#allocation5 + $0x1c0] sm:$0xff]
    %v116 = vld [vmem:[#allocation5 + $0x1c8] sm:$0xff]
    %v117 = vld [vmem:[#allocation5 + $0x1d0] sm:$0xff]
    %v118 = vld [vmem:[#allocation5 + $0x1d8] sm:$0xff]
    %v119 = vld [vmem:[#allocation5 + $0x1e0] sm:$0xff]
    %v120 = vld [vmem:[#allocation5 + $0x1e8] sm:$0xff]
    %v121 = vld [vmem:[#allocation5 + $0x1f0] sm:$0xff]
    %v122 = vld [vmem:[#allocation5 + $0x1f8] sm:$0xff]
    %v123 = vld [vmem:[#allocation7] sm:$0xf]
    %v125 = vlaneseq
    %v126 = vshrl.u32 %v125, 7
    %v127 = vsub.s32 0, %v126
    %v128 = vrot.slane %v123, %v127
    %v129 = vlaneseq
    %v130 = vshrl.u32 %v129, 7
    %v131 = vsub.s32 1, %v130
    %v132 = vrot.slane %v123, %v131
    %v133 = vlaneseq
    %v134 = vshrl.u32 %v133, 7
    %v135 = vsub.s32 2, %v134
    %v136 = vrot.slane %v123, %v135
    %v137 = vlaneseq
    %v138 = vshrl.u32 %v137, 7
    %v139 = vsub.s32 3, %v138
    %v140 = vrot.slane %v123, %v139
    %145 = vmatprep.subr.mxu0 %v60
    %146 = vmatpush1.msra.mxu0 %v59
    %147 = vmatprep.subr.mxu0 %v64
    %148 = vmatpush1.msra.mxu0 %v63
    %149 = vmatprep.subr.mxu0 %v68
    %150 = vmatpush1.msra.mxu0 %v67
    %151 = vmatprep.subr.mxu0 %v72
    %152 = vmatpush1.msra.mxu0 %v71
    %153 = vmatprep.subr.mxu0 %v76
    %154 = vmatpush1.msra.mxu0 %v75
    %155 = vmatprep.subr.mxu0 %v80
    %156 = vmatpush1.msra.mxu0 %v79
    %157 = vmatprep.subr.mxu0 %v84
    %158 = vmatpush1.msra.mxu0 %v83
    %159 = vmatprep.subr.mxu0 %v88
    %160 = vmatpush1.msra.mxu0 %v87
    %161 = vmatprep.subr.mxu0 %v92
    %162 = vmatpush1.msra.mxu0 %v91
    %163 = vmatprep.subr.mxu0 %v96
    %164 = vmatpush1.msra.mxu0 %v95
    %165 = vmatprep.subr.mxu0 %v100
    %166 = vmatpush1.msra.mxu0 %v99
    %167 = vmatprep.subr.mxu0 %v104
    %168 = vmatpush1.msra.mxu0 %v103
    %169 = vmatprep.subr.mxu0 %v108
    %170 = vmatpush1.msra.mxu0 %v107
    %171 = vmatprep.subr.mxu0 %v112
    %172 = vmatpush1.msra.mxu0 %v111
    %173 = vmatprep.subr.mxu0 %v116
    %174 = vmatpush1.msra.mxu0 %v115
    %175 = vmatprep.subr.mxu0 %v120
    %176 = vmatpush1.msra.mxu0 %v119
    %177 = vmatprep.subr.mxu0 0.0
    %178 = vmatpush1.msra.mxu0 0.0
    %179 = vmatprep.subr.mxu0 0.0
    %180 = vmatpush1.msra.mxu0 0.0
    %181 = vmatprep.subr.mxu0 0.0
    %182 = vmatpush1.msra.mxu0 0.0
    %183 = vmatprep.subr.mxu0 0.0
    %184 = vmatpush1.msra.mxu0 0.0
    %185 = vmatprep.subr.mxu0 0.0
    %186 = vmatpush1.msra.mxu0 0.0
    %187 = vmatprep.subr.mxu0 0.0
    %188 = vmatpush1.msra.mxu0 0.0
    %189 = vmatprep.subr.mxu0 0.0
    %190 = vmatpush1.msra.mxu0 0.0
    %191 = vmatprep.subr.mxu0 0.0
    %192 = vmatpush1.msra.mxu0 0.0
    %193 = vmatprep.subr.mxu0 0.0
    %194 = vmatpush1.msra.mxu0 0.0
    %195 = vmatprep.subr.mxu0 0.0
    %196 = vmatpush1.msra.mxu0 0.0
    %197 = vmatprep.subr.mxu0 0.0
    %198 = vmatpush1.msra.mxu0 0.0
    %199 = vmatprep.subr.mxu0 0.0
    %200 = vmatpush1.msra.mxu0 0.0
    %201 = vmatprep.subr.mxu0 0.0
    %202 = vmatpush1.msra.mxu0 0.0
    %203 = vmatprep.subr.mxu0 0.0
    %204 = vmatpush1.msra.mxu0 0.0
    %205 = vmatprep.subr.mxu0 0.0
    %206 = vmatpush1.msra.mxu0 0.0
    %207 = vmatprep.subr.mxu0 0.0
    %208 = vmatpush1.msra.mxu0 0.0
    %209 = vmatprep.mubr.f32.mxu0 0.0
    %210 = vmatmul.mubr.f32.gmra.mrb[0].mxu0 %v58
    %v211 = vpop.f32.mrb[0].mxu0
    %v212 = vadd.f32 %v128, %v211
    %v213 = vpop.f32.mrb[0].mxu0
    %v214 = vadd.f32 %v132, %v213
    %215 = vdwg.mxu0
    %216 = vmatprep.subr.mxu0 %v62
    %217 = vmatpush1.msra.mxu0 %v61
    %218 = vmatprep.subr.mxu0 %v66
    %219 = vmatpush1.msra.mxu0 %v65
    %220 = vmatprep.subr.mxu0 %v70
    %221 = vmatpush1.msra.mxu0 %v69
    %222 = vmatprep.subr.mxu0 %v74
    %223 = vmatpush1.msra.mxu0 %v73
    %224 = vmatprep.subr.mxu0 %v78
    %225 = vmatpush1.msra.mxu0 %v77
    %226 = vmatprep.subr.mxu0 %v82
    %227 = vmatpush1.msra.mxu0 %v81
    %228 = vmatprep.subr.mxu0 %v86
    %229 = vmatpush1.msra.mxu0 %v85
    %230 = vmatprep.subr.mxu0 %v90
    %231 = vmatpush1.msra.mxu0 %v89
    %232 = vmatprep.subr.mxu0 %v94
    %233 = vmatpush1.msra.mxu0 %v93
    %234 = vmatprep.subr.mxu0 %v98
    %235 = vmatpush1.msra.mxu0 %v97
    %236 = vmatprep.subr.mxu0 %v102
    %237 = vmatpush1.msra.mxu0 %v101
    %238 = vmatprep.subr.mxu0 %v106
    %239 = vmatpush1.msra.mxu0 %v105
    %240 = vmatprep.subr.mxu0 %v110
    %241 = vmatpush1.msra.mxu0 %v109
    %242 = vmatprep.subr.mxu0 %v114
    %243 = vmatpush1.msra.mxu0 %v113
    %244 = vmatprep.subr.mxu0 %v118
    %245 = vmatpush1.msra.mxu0 %v117
    %246 = vmatprep.subr.mxu0 %v122
    %247 = vmatpush1.msra.mxu0 %v121
    %248 = vmatprep.subr.mxu0 0.0
    %249 = vmatpush1.msra.mxu0 0.0
    %250 = vmatprep.subr.mxu0 0.0
    %251 = vmatpush1.msra.mxu0 0.0
    %252 = vmatprep.subr.mxu0 0.0
    %253 = vmatpush1.msra.mxu0 0.0
    %254 = vmatprep.subr.mxu0 0.0
    %255 = vmatpush1.msra.mxu0 0.0
    %256 = vmatprep.subr.mxu0 0.0
    %257 = vmatpush1.msra.mxu0 0.0
    %258 = vmatprep.subr.mxu0 0.0
    %259 = vmatpush1.msra.mxu0 0.0
    %260 = vmatprep.subr.mxu0 0.0
    %261 = vmatpush1.msra.mxu0 0.0
    %262 = vmatprep.subr.mxu0 0.0
    %263 = vmatpush1.msra.mxu0 0.0
    %264 = vmatprep.subr.mxu0 0.0
    %265 = vmatpush1.msra.mxu0 0.0
    %266 = vmatprep.subr.mxu0 0.0
    %267 = vmatpush1.msra.mxu0 0.0
    %268 = vmatprep.subr.mxu0 0.0
    %269 = vmatpush1.msra.mxu0 0.0
    %270 = vmatprep.subr.mxu0 0.0
    %271 = vmatpush1.msra.mxu0 0.0
    %272 = vmatprep.subr.mxu0 0.0
    %273 = vmatpush1.msra.mxu0 0.0
    %274 = vmatprep.subr.mxu0 0.0
    %275 = vmatpush1.msra.mxu0 0.0
    %276 = vmatprep.subr.mxu0 0.0
    %277 = vmatpush1.msra.mxu0 0.0
    %278 = vmatprep.subr.mxu0 0.0
    %279 = vmatpush1.msra.mxu0 0.0
    %280 = vmatprep.mubr.f32.mxu0 0.0
    %281 = vmatmul.mubr.f32.gmra.mrb[0].mxu0 %v58
    %v282 = vpop.f32.mrb[0].mxu0
    %v283 = vadd.f32 %v136, %v282
    %v284 = vpop.f32.mrb[0].mxu0
    %v285 = vadd.f32 %v140, %v284
    %286 = vdwg.mxu0
    %v287 = vxor.u32 %v212, 2147483648
    %v288 = vmul.f32 %v287, 1.442695
    %v289 = vpow.pop %v288
    %v290 = vadd.f32 %v289, 1.0
    %v291 = vrcp.pop %v290
    %v292 = vmul.f32 1.0, %v291
    %v293 = vxor.u32 %v214, 2147483648
    %v294 = vmul.f32 %v293, 1.442695
    %v295 = vpow.pop %v294
    %v296 = vadd.f32 %v295, 1.0
    %v297 = vrcp.pop %v296
    %v298 = vmul.f32 1.0, %v297
    %v299 = vtanh.pop %v283
    %v300 = vxor.u32 %v285, 2147483648
    %v301 = vmul.f32 %v300, 1.442695
    %v302 = vpow.pop %v301
    %v303 = vadd.f32 %v302, 1.0
    %v304 = vrcp.pop %v303
    %v305 = vmul.f32 1.0, %v304
    %v306 = vld [vmem:[%s3] sm:$0xff]
    %v307 = vmul.f32 %v298, %v306
    %v308 = vmul.f32 %v292, %v299
    %v309 = vadd.f32 %v307, %v308
    %v310 = vtanh.pop %v309
    %v311 = vmul.f32 %v305, %v310
    %312 = vst [vmem:[#allocation9] sm:$0xff] %v309
    %313 = vst [vmem:[#allocation8] sm:$0xff] %v311
    // Predicated region
    $region30: #{tpu_custom_call.1} parent=1 // pred_check
      _
    $region31: #{tpu_custom_call.1} parent=1 // pred_check_branch
      %315 = sbr.rel (0) target = $region33
    $region32: #{tpu_custom_call.1} parent=1 // pred_region
      %s317 = ssub.s32 128, 128
      %318 = vsyncadd [#allocation4], %s317
      %s320 = sshll.u32 [#allocation8], 4
      %s321 = int_to_ptr.vmem [resolvable:$true] %s320
      %323 = dma.vmem_to_hbm [thread:$0]  %s321, 128, %s4, [#allocation4]
    $region33: #{tpu_custom_call.1} parent=1 // pred_fallthru
      _
    // Predicated region
    $region34: #{tpu_custom_call.1} parent=1 // pred_check
      _
    $region35: #{tpu_custom_call.1} parent=1 // pred_check_branch
      %325 = sbr.rel (0) target = $region37
    $region36: #{tpu_custom_call.1} parent=1 // pred_region
      %s327 = ssub.s32 128, 128
      %328 = vsyncadd [#allocation10], %s327
      %s330 = sshll.u32 [#allocation9], 4
      %s331 = int_to_ptr.vmem [resolvable:$true] %s330
      %333 = dma.vmem_to_hbm [thread:$0]  %s331, 128, %s5, [#allocation10]
    $region37: #{tpu_custom_call.1} parent=1 // pred_fallthru
      _
    // Predicated region
    $region38: #{tpu_custom_call.1} parent=1 // pred_check
      _
    $region39: #{tpu_custom_call.1} parent=1 // pred_check_branch
      %335 = sbr.rel (0) target = $region41
    $region40: #{tpu_custom_call.1} parent=1 // pred_region
      %336 = dma.done [#allocation4], 128
    $region41: #{tpu_custom_call.1} parent=1 // pred_fallthru
      _
    // Predicated region
    $region42: #{tpu_custom_call.1} parent=1 // pred_check
      _
    $region43: #{tpu_custom_call.1} parent=1 // pred_check_branch
      %338 = sbr.rel (0) target = $region45
    $region44: #{tpu_custom_call.1} parent=1 // pred_region
      %339 = dma.done [#allocation10], 128
    $region45: #{tpu_custom_call.1} parent=1 // pred_fallthru
      _
    %340 = vsyncpa [#allocation3], 1
    %341 = vsyncpa [#allocation6], 1
    %342 = vsyncpa [#allocation4], 1
    %343 = vsyncpa [#allocation10], 1

</llo_original>
